<compile_context>
chip_gen: v5e
topology: v5e:2x2
jax: 0.10.0
libtpu: 0.0.40
codegen_flags: <defaults>
</compile_context>

<pallas_src>
import jax
import jax.numpy as jnp
import numpy as np
from jax.experimental import pallas as pl
from jax.experimental.pallas import tpu as pltpu


def _round_up(x, k):
    return ((int(x) + k - 1) // k) * k


# ----------------------------------------------------------------------------
# Kernel A (one-time, in prepare_stats): streaming reduction over the padded
# stats buffer Y (mp, fp) producing, per feature tile k:
#   yy partial  = sum over this tile of Y^2          -> (kt, 8, 128) lane 0
#   column sums = sum_i Y[i, tile]                   -> (1, fp)
# Grid = (kt feature tiles ["parallel" -> megacore split], rt row blocks
# ["arbitrary" -> sequential, accumulates into the same output blocks]).
# NOTE: the r axis MUST stay "arbitrary"/sequential and innermost — the
# accumulation into yy_ref / cs_ref relies on it revisiting the same block.
# Zero padding (rows or features) contributes nothing to either accumulator.
# ----------------------------------------------------------------------------
def _stats_reduce_kernel(y_ref, yy_ref, cs_ref):
    @pl.when(pl.program_id(1) == 0)
    def _():
        yy_ref[...] = jnp.zeros_like(yy_ref)
        cs_ref[...] = jnp.zeros_like(cs_ref)

    y = y_ref[...].astype(jnp.float32)          # bf16 storage -> f32 math
    yy_ref[...] += jnp.sum(y * y)               # scalar broadcast into (1,8,128)
    cs_ref[...] += jnp.sum(y, axis=0, keepdims=True)


def _choose_tf_init(feat):
    # lane tile for the one-time stats stream: big for bandwidth, mult. of 128
    return min(1024, _round_up(feat, 128))


def _choose_tm_init(m):
    # row block: (tm, tf) bf16 tile ~4 MiB at (2048, 1024); multiple of 16
    # for bf16 sublane packing.
    return min(2048, _round_up(m, 16))


def _choose_tf_step(feat):
    # per-step (batch) feature tile; batch is tiny so this is never large
    return min(8192, _round_up(feat, 128))


def prepare_stats(y, *, stats_dtype=jnp.bfloat16):
    """One-time: flatten/cast/pad the stats buffer and reduce it to
    (syy_c, mu). After this the big buffer is never touched again per step."""
    m = y.shape[0]
    feat = int(np.prod(y.shape[1:]))
    tf = _choose_tf_init(feat)
    tm = _choose_tm_init(m)
    fp = _round_up(feat, tf)
    mp = _round_up(m, tm)

    y2 = y.reshape(m, feat).astype(stats_dtype)
    if (mp, fp) != (m, feat):
        y2 = jnp.pad(y2, ((0, mp - m), (0, fp - feat)))

    kt = fp // tf
    rt = mp // tm
    # NOTE(v7x): kt is the only "parallel" axis; for tiny-feat stats kt may be
    # 1 and one TensorCore idles — acceptable, this pass runs once at init.
    yy_parts, colsum = pl.pallas_call(
        _stats_reduce_kernel,
        out_shape=(jax.ShapeDtypeStruct((kt, 8, 128), jnp.float32),
                   jax.ShapeDtypeStruct((1, fp), jnp.float32)),
        grid_spec=pltpu.PrefetchScalarGridSpec(
            num_scalar_prefetch=0,
            grid=(kt, rt),
            in_specs=[pl.BlockSpec((tm, tf), lambda k, r: (r, k))],
            out_specs=(pl.BlockSpec((1, 8, 128), lambda k, r: (k, 0, 0)),
                       pl.BlockSpec((1, tf), lambda k, r: (0, k)))),
        compiler_params=pltpu.CompilerParams(
            dimension_semantics=("parallel", "arbitrary"),
            vmem_limit_bytes=48 * 1024 * 1024),
    )(y2)

    yy = jnp.sum(yy_parts[:, 0, 0])                 # sum_i ||Y_i||^2
    mu = colsum / np.float32(m)                      # (1, fp) mean row
    syy_c = yy - m * jnp.sum(mu * mu)                # sum_i ||Y_i - mu||^2

    # Re-pad mu once to the per-step feature tile width (zeros beyond feat).
    tf_step = _choose_tf_step(feat)
    fp_step = _round_up(feat, tf_step)
    if fp_step <= fp:
        mu_step = mu[:, :fp_step]
    else:
        mu_step = jnp.pad(mu, ((0, 0), (0, fp_step - fp)))

    return {"mu": mu_step, "syy_c": syy_c, "m": m, "feat": feat,
            "tf_step": tf_step}


# ----------------------------------------------------------------------------
# Kernel B (per Adam step): sum_j ||X_j - mu||^2 over the small batch, tiled
# along the feature axis only (one "parallel" grid axis, each tile writes its
# own (1,8,128) partial block). Zero-padded feature columns of X and mu cancel.
# ----------------------------------------------------------------------------
def _batch_centered_sq_kernel(x_ref, mu_ref, o_ref):
    d = x_ref[...] - mu_ref[...]                    # (n, tf) - (1, tf)
    o_ref[...] = jnp.zeros_like(o_ref) + jnp.sum(d * d)


def l2_mean_vs_stats(x, stats):
    """mean_ij ||Y_i - X_j||^2 / feat  with Y summarized by (syy_c, mu)."""
    n = x.shape[0]
    feat = int(np.prod(x.shape[1:]))
    assert feat == stats["feat"]
    x2 = x.reshape(n, feat)
    if x2.dtype != jnp.float32:
        x2 = x2.astype(jnp.float32)
    fp = stats["mu"].shape[1]
    if fp != feat:
        x2 = jnp.pad(x2, ((0, 0), (0, fp - feat)))

    tf = stats["tf_step"]
    kt = fp // tf
    parts = pl.pallas_call(
        _batch_centered_sq_kernel,
        out_shape=jax.ShapeDtypeStruct((kt, 8, 128), jnp.float32),
        grid_spec=pltpu.PrefetchScalarGridSpec(
            num_scalar_prefetch=0,
            grid=(kt,),
            in_specs=[pl.BlockSpec((n, tf), lambda k: (0, k)),
                      pl.BlockSpec((1, tf), lambda k: (0, k))],
            out_specs=pl.BlockSpec((1, 8, 128), lambda k: (k, 0, 0))),
        compiler_params=pltpu.CompilerParams(
            dimension_semantics=("parallel",)),
    )(x2, stats["mu"])

    sxx_c = jnp.sum(parts[:, 0, 0])                 # sum_j ||X_j - mu||^2
    m = stats["m"]
    total = n * stats["syy_c"] + m * sxx_c          # cross term is exactly 0
    return total / (m * n) / feat


# ----------------------------------------------------------------------------
# Module-level wrapper (deterministic synthetic "buffers"; no checkpoint I/O)
# ----------------------------------------------------------------------------
class LatentAugPallas:
    def __init__(self, *, batch_size, num_ws, w_dim, modalities, res,
                 n_stats, w_latent, w_pix, alpha, soft_aug, key,
                 stats_dtype=jnp.bfloat16):
        self.batch_size = batch_size
        self.num_ws = num_ws
        self.w_dim = w_dim
        self.modalities = modalities
        self.res = res
        self.w_latent = w_latent
        self.w_pix = w_pix
        self.alpha = alpha
        self.soft_aug = soft_aug
        k1, k2 = jax.random.split(key)
        # register_buffer('W', ...): latent stats (n_stats, num_ws, w_dim)
        self.W = jax.random.normal(k1, (n_stats, num_ws, w_dim), jnp.float32)
        # register_buffer('X', ...): image stats (n_stats, C, H, W), NCHW
        self.X = jax.random.normal(k2, (n_stats, modalities, res, res),
                                   jnp.float32)
        # One-time streaming reduction of the static stats buffers; the full
        # buffers are never re-read in forward() (per-step HBM = batch only).
        self._W_stats = prepare_stats(self.W, stats_dtype=stats_dtype)
        self._X_stats = prepare_stats(self.X, stats_dtype=stats_dtype)

    def broadcasting(self, latent):  # (B, 1, D) -> (B, num_ws, D)
        return jnp.broadcast_to(latent, (latent.shape[0], self.num_ws,
                                         latent.shape[2]))

    def calc_loss_latent(self, ws):
        return self.w_latent * l2_mean_vs_stats(ws, self._W_stats)

    def calc_loss_pix(self, x_tilde):
        # TODO(synk): transform_center_crop is identity when crop==res; the
        # general crop transform is dataset glue and not translated.
        # Per-modality loop fused: sum_c[mean over (1,H,W)]/C == mean over the
        # full (C,H,W) feature axis -> one kernel launch, one HBM pass.
        return self.w_pix * l2_mean_vs_stats(x_tilde, self._X_stats)

    # Blend + broadcast in plain jnp: output is a few KB, XLA fuses it with
    # whatever consumes w_aug (e.g. StyleGAN synthesis input prep).
    def smooth_aug(self, w, w_tilde):
        w_aug = self.alpha * w_tilde + (1.0 - self.alpha) * w
        return self.broadcasting(w_aug)

    def hard_aug(self, w, w_tilde):
        return self.broadcasting(w_tilde)

    def forward(self, w, x_tilde, w_opt):
        """w, w_opt: (B, 1, w_dim); x_tilde: (B, C, res, res) NCHW.

        x_tilde stands in for G.synthesis(broadcasting(w_opt)) and w_opt for
        the Adam-optimized latent; the optimization loop itself needs the
        pretrained StyleGAN / VGG networks and is not translated.
        """
        ws = self.broadcasting(w)
        loss_latent = self.calc_loss_latent(ws)
        # TODO(synk): loss_disc needs the pretrained StyleGAN discriminator D.
        loss_pix = self.calc_loss_pix(x_tilde)
        # TODO(synk): loss_lpips needs VGG16 / LPIPS feature networks.
        loss = -loss_latent - loss_pix
        w_aug = (self.smooth_aug(w, w_opt) if self.soft_aug
                 else self.hard_aug(w, w_opt))
        # TODO(synk): imgAB_aug = G.synthesis(w_aug) needs pretrained StyleGAN.
        return loss, loss_latent, loss_pix, w_aug


# ----------------------------------------------------------------------------
# Pure-JAX reference (for correctness check)
# ----------------------------------------------------------------------------
def _ref_l2(X, Y):
    n = X.shape[0]
    m = Y.shape[0]
    feat = int(np.prod(X.shape[1:]))
    Xf = X.reshape(n, feat)
    Yf = Y.reshape(m, feat)
    D = (jnp.sum(Yf**2, 1)[:, None] + jnp.sum(Xf**2, 1)[None, :]
         - 2.0 * Yf @ Xf.T)
    return jnp.sum(D) / (m * n) / feat


if __name__ == "__main__":
    B, num_ws, w_dim = 2, 8, 32
    C, res, n_stats = 2, 16, 6
    alpha = 0.7

    key = jax.random.PRNGKey(0)
    k_mod, k_w, k_wopt, k_img = jax.random.split(key, 4)

    mod = LatentAugPallas(batch_size=B, num_ws=num_ws, w_dim=w_dim,
                          modalities=C, res=res, n_stats=n_stats,
                          w_latent=1.0, w_pix=1.0, alpha=alpha,
                          soft_aug=True, key=k_mod)

    w = jax.random.normal(k_w, (B, 1, w_dim), jnp.float32)
    w_opt = jax.random.normal(k_wopt, (B, 1, w_dim), jnp.float32)
    x_tilde = jax.random.normal(k_img, (B, C, res, res), jnp.float32)

    loss, loss_latent, loss_pix, w_aug = mod.forward(w, x_tilde, w_opt)
    jax.block_until_ready((loss, loss_latent, loss_pix, w_aug))

    # Correctness checks vs pure-JAX reference.  Stats are stored in bf16
    # (perf-review item), so the reference uses the same quantized stats; the
    # kernel itself accumulates in f32 -> tight rtol still holds.
    Wq = mod.W.astype(jnp.bfloat16).astype(jnp.float32)
    Xq = mod.X.astype(jnp.bfloat16).astype(jnp.float32)
    ws = mod.broadcasting(w)
    ref_latent = _ref_l2(ws, Wq)
    ref_pix = sum(_ref_l2(x_tilde[:, i:i + 1], Xq[:, i:i + 1])
                  for i in range(C)) / C
    ref_waug = jnp.broadcast_to(alpha * w_opt + (1 - alpha) * w,
                                (B, num_ws, w_dim))

    np.testing.assert_allclose(np.asarray(loss_latent), np.asarray(ref_latent),
                               rtol=1e-4, atol=1e-5)
    np.testing.assert_allclose(np.asarray(loss_pix), np.asarray(ref_pix),
                               rtol=1e-4, atol=1e-5)
    np.testing.assert_allclose(np.asarray(w_aug), np.asarray(ref_waug),
                               rtol=1e-6, atol=1e-6)

    # hard-aug path
    w_aug_hard = mod.hard_aug(w, w_opt)
    jax.block_until_ready(w_aug_hard)
    np.testing.assert_allclose(
        np.asarray(w_aug_hard),
        np.asarray(jnp.broadcast_to(w_opt, (B, num_ws, w_dim))),
        rtol=1e-6, atol=1e-6)

    assert np.isfinite(np.asarray(loss)).all()
    print("KERNEL_OK")
</pallas_src>

<mosaic_0001>
module attributes {stable_mosaic.version = 11 : i64} {
  func.func @_stats_reduce_kernel(%arg0: i32, %arg1: i32, %arg2: memref<16x256xbf16, #tpu.memory_space<vmem>>, %arg3: memref<1x8x128xf32, #tpu.memory_space<vmem>>, %arg4: memref<1x256xf32, #tpu.memory_space<vmem>>) attributes {dimension_semantics = [#tpu.dimension_semantics<parallel>, #tpu.dimension_semantics<arbitrary>], iteration_bounds = array<i64: 1, 1>, scalar_prefetch = 0 : i64, scratch_operands = 0 : i64, tpu.core_type = #tpu.core_type<tc>, window_params = [{transform_indices = @transform_0, window_bounds = array<i64: 16, 256>}, {transform_indices = @transform_1, window_bounds = array<i64: 1, 8, 128>}, {transform_indices = @transform_2, window_bounds = array<i64: 1, 256>}]} {
    %c0_i32 = arith.constant 0 : i32
    %0 = arith.cmpi eq, %arg1, %c0_i32 : i32
    %1 = arith.extui %0 : i1 to i32
    %c0_i32_0 = arith.constant 0 : i32
    %2 = arith.cmpi ne, %1, %c0_i32_0 : i32
    scf.if %2 {
      %cst_13 = arith.constant 0.000000e+00 : f32
      %19 = vector.broadcast %cst_13 : f32 to vector<1x8x128xf32>
      %c0_14 = arith.constant 0 : index
      %c0_15 = arith.constant 0 : index
      %c0_16 = arith.constant 0 : index
      %20 = vector.load %arg3[%c0_14, %c0_15, %c0_16] : memref<1x8x128xf32, #tpu.memory_space<vmem>>, vector<1x8x128xf32>
      tpu.vector_store %arg3[%c0_14, %c0_15, %c0_16], %19 {strides = array<i32>} : memref<1x8x128xf32, #tpu.memory_space<vmem>>, vector<1x8x128xf32>,
      %cst_17 = arith.constant 0.000000e+00 : f32
      %21 = vector.broadcast %cst_17 : f32 to vector<1x256xf32>
      %c0_18 = arith.constant 0 : index
      %c0_19 = arith.constant 0 : index
      %22 = vector.load %arg4[%c0_18, %c0_19] : memref<1x256xf32, #tpu.memory_space<vmem>>, vector<1x256xf32>
      tpu.vector_store %arg4[%c0_18, %c0_19], %21 {strides = array<i32>} : memref<1x256xf32, #tpu.memory_space<vmem>>, vector<1x256xf32>,
    } else {
    }
    %c0 = arith.constant 0 : index
    %c0_1 = arith.constant 0 : index
    %3 = vector.load %arg2[%c0, %c0_1] : memref<16x256xbf16, #tpu.memory_space<vmem>>, vector<16x256xbf16>
    %4 = arith.extf %3 : vector<16x256xbf16> to vector<16x256xf32>
    %c0_2 = arith.constant 0 : index
    %c0_3 = arith.constant 0 : index
    %c0_4 = arith.constant 0 : index
    %5 = vector.load %arg3[%c0_2, %c0_3, %c0_4] : memref<1x8x128xf32, #tpu.memory_space<vmem>>, vector<1x8x128xf32>
    %6 = arith.mulf %4, %4 : vector<16x256xf32>
    %7 = vector.shape_cast %6 : vector<16x256xf32> to vector<1x16x256xf32>
    %cst = arith.constant dense<0.000000e+00> : vector<1xf32>
    %8 = vector.multi_reduction <add>, %7, %cst [1, 2] : vector<1x16x256xf32> to vector<1xf32>
    %9 = vector.shape_cast %8 : vector<1xf32> to vector<1x1x1xf32>
    %10 = vector.extract %9[0, 0, 0] : f32 from vector<1x1x1xf32>
    %11 = vector.broadcast %10 : f32 to vector<1x8x128xf32>
    %12 = arith.addf %5, %11 : vector<1x8x128xf32>
    %c0_5 = arith.constant 0 : index
    %c0_6 = arith.constant 0 : index
    %c0_7 = arith.constant 0 : index
    %13 = vector.load %arg3[%c0_5, %c0_6, %c0_7] : memref<1x8x128xf32, #tpu.memory_space<vmem>>, vector<1x8x128xf32>
    tpu.vector_store %arg3[%c0_5, %c0_6, %c0_7], %12 {strides = array<i32>} : memref<1x8x128xf32, #tpu.memory_space<vmem>>, vector<1x8x128xf32>,
    %c0_8 = arith.constant 0 : index
    %c0_9 = arith.constant 0 : index
    %14 = vector.load %arg4[%c0_8, %c0_9] : memref<1x256xf32, #tpu.memory_space<vmem>>, vector<1x256xf32>
    %cst_10 = arith.constant dense<0.000000e+00> : vector<256xf32>
    %15 = vector.multi_reduction <add>, %4, %cst_10 [0] : vector<16x256xf32> to vector<256xf32>
    %16 = vector.shape_cast %15 : vector<256xf32> to vector<1x256xf32>
    %17 = arith.addf %14, %16 : vector<1x256xf32>
    %c0_11 = arith.constant 0 : index
    %c0_12 = arith.constant 0 : index
    %18 = vector.load %arg4[%c0_11, %c0_12] : memref<1x256xf32, #tpu.memory_space<vmem>>, vector<1x256xf32>
    tpu.vector_store %arg4[%c0_11, %c0_12], %17 {strides = array<i32>} : memref<1x256xf32, #tpu.memory_space<vmem>>, vector<1x256xf32>,
    return
  }
  func.func @transform_0(%arg0: i32, %arg1: i32) -> (i32, i32) {
    %c0_i32 = arith.constant 0 : i32
    return %arg1, %arg0 : i32, i32
  }
  func.func @transform_1(%arg0: i32, %arg1: i32) -> (i32, i32, i32) {
    %c0_i32 = arith.constant 0 : i32
    %c0_i32_0 = arith.constant 0 : i32
    %c0_i32_1 = arith.constant 0 : i32
    return %arg0, %c0_i32, %c0_i32_0 : i32, i32, i32
  }
  func.func @transform_2(%arg0: i32, %arg1: i32) -> (i32, i32) {
    %c0_i32 = arith.constant 0 : i32
    %c0_i32_0 = arith.constant 0 : i32
    return %c0_i32, %arg0 : i32, i32
  }
}

</mosaic_0001>

<llo_original>
// kernel: tpu_custom_call.1
$region0: #{tpu_custom_call.1}
  #allocation0 [shape = 'u32[]', space=smem, size = 0x4, offset = 0x4, fixed_abs, tag = 'smem constant byte address 0x4 - core index']
  #allocation1 [shape = 'u32[72,128]{1,0:T(1,128)}', space=vmem, size = 0x9000, scoped, tag = 'internal scratch']
  %s0 = inlined_call_operand.hbm [shape: bf16[16,256], index: 0, kind: input, shape index: {}]
  %s1 = inlined_call_operand.hbm [shape: f32[1,8,128], index: 1, kind: output, shape index: {0}]
  %s2 = inlined_call_operand.hbm [shape: f32[1,256], index: 2, kind: output, shape index: {1}]
  %3 = xla_tuple %s1, %s2
  %s4 = sld [smem:[#allocation0]]
  $region30: #{tpu_custom_call.1} parent=0
    _
  %s6 = ssub.s32 1, %s4
  %s7 = scalar_select 0, %s6, %s4
  $region1: #{tpu_custom_call.1} parent=0
    #allocation2 [shape = 'u8[8192]{0}', space=vmem, size = 0x2000, scoped, tag = 'input window, operand 0, single buffered']
    #allocation3 [shape = 's32[1]{0}', space=sflag, size = 0x4, scoped, tag = 'scoped memory for tpu_custom_call.1']
    #allocation4 [shape = 's32[1]{0}', space=sflag, size = 0x4, scoped, tag = 'scoped memory for tpu_custom_call.1']
    #allocation5 [shape = 'u8[4096]{0}', space=vmem, size = 0x1000, scoped, tag = 'output window, operand 0, single buffered']
    #allocation6 [shape = 'u8[1024]{0}', space=vmem, size = 0x400, scoped, tag = 'output window, operand 1, single buffered']
    #allocation7 [shape = 's32[1]{0}', space=sflag, size = 0x4, scoped, tag = 'scoped memory for tpu_custom_call.1']
    %8 = vsyncpa [#allocation3], 0
    %9 = vsyncpa [#allocation4], 0
    %10 = vsyncpa [#allocation7], 0
    // Predicated region
    $region2: #{tpu_custom_call.1} parent=1 // pred_check
      _
    $region3: #{tpu_custom_call.1} parent=1 // pred_check_branch
      %12 = sbr.rel (0) target = $region5
    $region4: #{tpu_custom_call.1} parent=1 // pred_region
      %14 = vsyncadd [#allocation3], 0
      %s15 = sshll.u32 %s0, 4
      %s16 = int_to_ptr.hbm [resolvable:$true] %s15
      %s17 = sshll.u32 [#allocation2], 4
      %s18 = int_to_ptr.vmem [resolvable:$true] %s17
      %23 = dma.hbm_to_vmem [thread:$0]  %s16, 256, %s18, [#allocation3], 128, 128, 8
    $region5: #{tpu_custom_call.1} parent=1 // pred_fallthru
      _
    // Predicated region
    $region6: #{tpu_custom_call.1} parent=1 // pred_check
      _
    $region7: #{tpu_custom_call.1} parent=1 // pred_check_branch
      %25 = sbr.rel (0) target = $region9
    $region8: #{tpu_custom_call.1} parent=1 // pred_region
      %27 = dma.done [#allocation3], 256
    $region9: #{tpu_custom_call.1} parent=1 // pred_fallthru
      _
    %p28 = scmp.eq.s32.totalorder 0, 0
    // Predicated region
    $region10: #{tpu_custom_call.1} parent=1 // pred_check
      %p29 = pneg %p28
    $region11: #{tpu_custom_call.1} parent=1 // pred_check_branch
      %31 = sbr.rel (%p29) target = $region13
    $region12: #{tpu_custom_call.1} parent=1 // pred_region
      %32 = vst [vmem:[#allocation5] sm:$0xff] 0.0
      %v33 = vlaneseq
      %vm34 = vcmp.ge.s32.totalorder %v33, 0
      %vm35 = vcmp.lt.s32.totalorder %v33, 256
      %vm36 = vmand %vm34, %vm35
      %37 = vst.msk [vmem:[#allocation6] sm:$0x3] %vm36, 0.0
    $region13: #{tpu_custom_call.1} parent=1 // pred_fallthru
      _
    %v38 = vld [vmem:[#allocation2] sm:$0xff]
    %v39 = vld [vmem:[#allocation2 + $0x8] sm:$0xff]
    %v40 = vunpack.c.l.bf16 %v38
    %v41 = vunpack.c.h.bf16 %v38
    %v42 = vunpack.c.l.bf16 %v39
    %v43 = vunpack.c.h.bf16 %v39
    %v44 = vld [vmem:[#allocation5] sm:$0xff]
    %v45 = vmul.f32 %v40, %v40
    %v46 = vmul.f32 %v41, %v41
    %v47 = vmul.f32 %v42, %v42
    %v48 = vmul.f32 %v43, %v43
    %v49 = vadd.f32 %v45, %v46
    %v50 = vadd.f32 %v49, %v47
    %v51 = vadd.f32 %v50, %v48
    %52 = vadd.xlane.f32.xlu0 %v51
    %v53 = vpop.xlane.xlu0 %52
    %v54 = vrot.slane %v53, 4
    %v55 = vadd.f32 %v53, %v54
    %v56 = vrot.slane %v55, 2
    %v57 = vadd.f32 %v55, %v56
    %v58 = vrot.slane %v57, 1
    %v59 = vadd.f32 %v57, %v58
    %s60 = vtos %v59
    %v61 = vstv %s60
    %v62 = vadd.f32 %v44, %v61
    %63 = vst [vmem:[#allocation5] sm:$0xff] %v62
    %v64 = vld [vmem:[#allocation6] sm:$0x3]
    %v65 = vadd.f32 %v40, %v42
    %v66 = vrot.slane %v65, 4
    %v67 = vadd.f32 %v65, %v66
    %v68 = vrot.slane %v67, 2
    %v69 = vadd.f32 %v67, %v68
    %v70 = vrot.slane %v69, 1
    %v71 = vadd.f32 %v69, %v70
    %v72 = vadd.f32 %v41, %v43
    %v73 = vrot.slane %v72, 4
    %v74 = vadd.f32 %v72, %v73
    %v75 = vrot.slane %v74, 2
    %v76 = vadd.f32 %v74, %v75
    %v77 = vrot.slane %v76, 1
    %v78 = vadd.f32 %v76, %v77
    %v81 = vrot.slane %v78, 7
    %vm82 = vcmask 1040384
    %v83 = vsel %vm82, %v71, %v81
    %v85 = vadd.f32 %v64, %v83
    %v86 = vlaneseq
    %vm87 = vcmp.ge.s32.totalorder %v86, 0
    %vm88 = vcmp.lt.s32.totalorder %v86, 256
    %vm89 = vmand %vm87, %vm88
    %90 = vst.msk [vmem:[#allocation6] sm:$0x3] %vm89, %v85
    // Predicated region
    $region14: #{tpu_custom_call.1} parent=1 // pred_check
      _
    $region15: #{tpu_custom_call.1} parent=1 // pred_check_branch
      %92 = sbr.rel (0) target = $region17
    $region16: #{tpu_custom_call.1} parent=1 // pred_region
      %94 = vsyncadd [#allocation4], 0
      %s96 = sshll.u32 [#allocation5], 4
      %s97 = int_to_ptr.vmem [resolvable:$true] %s96
      %s98 = sshll.u32 %s1, 4
      %s99 = int_to_ptr.hbm [resolvable:$true] %s98
      %101 = dma.vmem_to_hbm [thread:$0]  %s97, 128, %s99, [#allocation4]
    $region17: #{tpu_custom_call.1} parent=1 // pred_fallthru
      _
    // Predicated region
    $region18: #{tpu_custom_call.1} parent=1 // pred_check
      _
    $region19: #{tpu_custom_call.1} parent=1 // pred_check_branch
      %103 = sbr.rel (0) target = $region21
    $region20: #{tpu_custom_call.1} parent=1 // pred_region
      %105 = vsyncadd [#allocation7], 0
      %s107 = sshll.u32 [#allocation6], 4
      %s108 = int_to_ptr.vmem [resolvable:$true] %s107
      %s109 = sshll.u32 %s2, 4
      %s110 = int_to_ptr.hbm [resolvable:$true] %s109
      %112 = dma.vmem_to_hbm [thread:$0]  %s108, 32, %s110, [#allocation7]
    $region21: #{tpu_custom_call.1} parent=1 // pred_fallthru
      _
    // Predicated region
    $region22: #{tpu_custom_call.1} parent=1 // pred_check
      _
    $region23: #{tpu_custom_call.1} parent=1 // pred_check_branch
      %114 = sbr.rel (0) target = $region25
    $region24: #{tpu_custom_call.1} parent=1 // pred_region
      %116 = dma.done [#allocation4], 128
    $region25: #{tpu_custom_call.1} parent=1 // pred_fallthru
      _
    // Predicated region
    $region26: #{tpu_custom_call.1} parent=1 // pred_check
      _
    $region27: #{tpu_custom_call.1} parent=1 // pred_check_branch
      %118 = sbr.rel (0) target = $region29
    $region28: #{tpu_custom_call.1} parent=1 // pred_region
      %120 = dma.done [#allocation7], 32
    $region29: #{tpu_custom_call.1} parent=1 // pred_fallthru
      _
    %121 = vsyncpa [#allocation3], 1
    %122 = vsyncpa [#allocation4], 1
    %123 = vsyncpa [#allocation7], 1

</llo_original>
